<compile_context>
chip_gen: v5e
topology: v5e:2x2
jax: 0.10.0
libtpu: 0.0.40
codegen_flags: <defaults>
</compile_context>

<pallas_src>
import functools

import jax
import jax.numpy as jnp
from jax.experimental import pallas as pl
from jax.experimental.pallas import tpu as pltpu


def _round_up(n, m):
    return ((n + m - 1) // m) * m


@functools.lru_cache(maxsize=1)
def _tensorcores_per_chip():
    """Best-effort detection of TensorCores per chip (2 on v7x, else 1)."""
    try:
        kind = jax.devices()[0].device_kind.lower()
        if "v7" in kind or "7x" in kind:
            return 2
    except Exception:
        pass
    return 1


def _mlp_kernel(x_ref,
                w1_ref, b1_ref,
                w2_ref, b2_ref,
                w3_ref, b3_ref,
                w4_ref, b4_ref,
                o_ref):
    """Fused 4-layer MLP: (Linear+ReLU) x3 -> Linear on one (TB, in_dim) batch tile.

    Weights/biases are full-array (VMEM-resident across the batch grid). Biases stay
    f32 and add into the f32 MXU accumulator; matmul operands may be bf16.
    """
    f32 = jnp.float32
    # Cast inside the kernel (VPU, hidden under the MXU) instead of a wrapper-side
    # XLA cast that would add a full HBM read+write pass over x.
    x = x_ref[...].astype(w1_ref.dtype)

    h = jnp.dot(x, w1_ref[...], preferred_element_type=f32) + b1_ref[...]
    h = jnp.maximum(h, 0.0).astype(w2_ref.dtype)

    h = jnp.dot(h, w2_ref[...], preferred_element_type=f32) + b2_ref[...]
    h = jnp.maximum(h, 0.0).astype(w3_ref.dtype)

    h = jnp.dot(h, w3_ref[...], preferred_element_type=f32) + b3_ref[...]
    h = jnp.maximum(h, 0.0).astype(w4_ref.dtype)

    h = jnp.dot(h, w4_ref[...], preferred_element_type=f32) + b4_ref[...]

    o_ref[...] = h.astype(o_ref.dtype)


@functools.partial(jax.jit, static_argnames=("tile_b", "compute_dtype"))
def twentyclassification_forward(x, params, *, tile_b=2048, compute_dtype=jnp.bfloat16):
    """Forward pass of twentyclassification as a single fused, batch-tiled Pallas kernel.

    x: (B, in_dim) float32
    params: dict with w1..w4 stored as (in, out) and b1..b4 as (1, out), float32
    """
    B, in_dim = x.shape
    out_dim = params["w4"].shape[1]

    # --- batch tile: multiple of 8 sublanes; on 2-TC chips ensure >=2 grid steps ---
    tb = _round_up(min(int(tile_b), _round_up(B, 8)), 8)
    n_tc = _tensorcores_per_chip()
    if n_tc > 1 and B >= 8 * n_tc:
        tb = min(tb, _round_up(pl.cdiv(B, n_tc), 8))
    b_pad = _round_up(B, tb)
    if b_pad != B:
        # TODO(synk): handle the ragged tail in-kernel (masked tail store) to avoid this
        # extra HBM pass over x when B is not a tile multiple.
        x = jnp.pad(x, ((0, b_pad - B), (0, 0)))

    cd = compute_dtype
    # x is NOT cast here -- it is cast inside the kernel.
    w1 = params["w1"].astype(cd)
    w2 = params["w2"].astype(cd)
    w3 = params["w3"].astype(cd)
    w4 = params["w4"].astype(cd)
    # Biases stay f32: they add into the f32 accumulator regardless of operand dtype.
    b1 = params["b1"].astype(jnp.float32)
    b2 = params["b2"].astype(jnp.float32)
    b3 = params["b3"].astype(jnp.float32)
    b4 = params["b4"].astype(jnp.float32)

    grid = (pl.cdiv(b_pad, tb),)

    def resident(a):
        # Full array, same block for every grid step -> stays VMEM-resident.
        return pl.BlockSpec(a.shape, lambda i: tuple(0 for _ in a.shape))

    in_specs = [
        pl.BlockSpec((tb, in_dim), lambda i: (i, 0)),   # batch-tiled activations
        resident(w1), resident(b1),
        resident(w2), resident(b2),
        resident(w3), resident(b3),
        resident(w4), resident(b4),
    ]
    # Output at true width: block last dim == full array dim (legal), so no padded
    # 128-wide slab and no post-kernel feature slice.
    out_specs = pl.BlockSpec((tb, out_dim), lambda i: (i, 0))

    out = pl.pallas_call(
        _mlp_kernel,
        out_shape=jax.ShapeDtypeStruct((b_pad, out_dim), jnp.float32),
        grid=grid,
        in_specs=in_specs,
        out_specs=out_specs,
        compiler_params=pltpu.CompilerParams(
            dimension_semantics=("parallel",),   # shard batch tiles across TCs (v7x)
        ),
    )(x, w1, b1, w2, b2, w3, b3, w4, b4)

    return out if b_pad == B else out[:B]


def init_params(key, in_dim, n_hidden_1, n_hidden_2, n_hidden_3, out_dim):
    """Deterministic init matching nn.Linear default: U(-1/sqrt(fan_in), 1/sqrt(fan_in))."""
    dims = [(in_dim, n_hidden_1), (n_hidden_1, n_hidden_2),
            (n_hidden_2, n_hidden_3), (n_hidden_3, out_dim)]
    params = {}
    for i, (fan_in, fan_out) in enumerate(dims, start=1):
        key, kw, kb = jax.random.split(key, 3)
        bound = 1.0 / jnp.sqrt(jnp.float32(fan_in))
        # stored as (in, out) so the kernel computes x @ W + b
        params[f"w{i}"] = jax.random.uniform(
            kw, (fan_in, fan_out), jnp.float32, minval=-bound, maxval=bound)
        params[f"b{i}"] = jax.random.uniform(
            kb, (1, fan_out), jnp.float32, minval=-bound, maxval=bound)
    return params


def reference_forward(x, params):
    h = jnp.maximum(x @ params["w1"] + params["b1"], 0.0)
    h = jnp.maximum(h @ params["w2"] + params["b2"], 0.0)
    h = jnp.maximum(h @ params["w3"] + params["b3"], 0.0)
    return h @ params["w4"] + params["b4"]


if __name__ == "__main__":
    key = jax.random.PRNGKey(0)
    key, kx, kx2 = jax.random.split(key, 3)

    # Small shapes consistent with the module's forward: (batch, in_dim) features.
    B, in_dim = 8, 32
    n_hidden_1, n_hidden_2, n_hidden_3 = 64, 64, 32
    out_dim = 20

    params = init_params(key, in_dim, n_hidden_1, n_hidden_2, n_hidden_3, out_dim)
    x = jax.random.normal(kx, (B, in_dim), jnp.float32)

    # 1) f32 path, single tile (tiny batch): strict check vs reference.
    out = twentyclassification_forward(x, params, compute_dtype=jnp.float32)
    out = jax.block_until_ready(out)
    ref = reference_forward(x, params)
    assert out.shape == (B, out_dim), out.shape
    assert jnp.allclose(out, ref, atol=1e-5, rtol=1e-5), "f32 mismatch vs reference"

    # 2) multi-tile grid + ragged batch (B not a tile multiple), still f32-strict.
    B2 = 300
    x2 = jax.random.normal(kx2, (B2, in_dim), jnp.float32)
    out2 = jax.block_until_ready(
        twentyclassification_forward(x2, params, tile_b=128,
                                     compute_dtype=jnp.float32))
    ref2 = reference_forward(x2, params)
    assert out2.shape == (B2, out_dim), out2.shape
    assert jnp.allclose(out2, ref2, atol=1e-5, rtol=1e-5), "tiled mismatch vs reference"

    # 3) default perf path: bf16 operands (MXU-native), f32 accumulation, default TB.
    out_bf16 = jax.block_until_ready(twentyclassification_forward(x2, params))
    assert out_bf16.shape == (B2, out_dim), out_bf16.shape
    assert jnp.allclose(out_bf16, ref2, atol=5e-2, rtol=5e-2), "bf16 mismatch vs reference"

    print("KERNEL_OK")
</pallas_src>

<mosaic_0001>
module attributes {stable_mosaic.version = 11 : i64} {
  func.func @_mlp_kernel(%arg0: i32, %arg1: memref<8x32xf32, #tpu.memory_space<vmem>>, %arg2: memref<32x64xf32, #tpu.memory_space<vmem>>, %arg3: memref<1x64xf32, #tpu.memory_space<vmem>>, %arg4: memref<64x64xf32, #tpu.memory_space<vmem>>, %arg5: memref<1x64xf32, #tpu.memory_space<vmem>>, %arg6: memref<64x32xf32, #tpu.memory_space<vmem>>, %arg7: memref<1x32xf32, #tpu.memory_space<vmem>>, %arg8: memref<32x20xf32, #tpu.memory_space<vmem>>, %arg9: memref<1x20xf32, #tpu.memory_space<vmem>>, %arg10: memref<8x20xf32, #tpu.memory_space<vmem>>) attributes {dimension_semantics = [#tpu.dimension_semantics<parallel>], iteration_bounds = array<i64: 1>, scalar_prefetch = 0 : i64, scratch_operands = 0 : i64, tpu.core_type = #tpu.core_type<tc>, window_params = [{transform_indices = @transform_0, window_bounds = array<i64: 8, 32>}, {pipeline_mode = #tpu.pipeline_mode<synchronous>, transform_indices = @transform_1, window_bounds = array<i64: 32, 64>}, {pipeline_mode = #tpu.pipeline_mode<synchronous>, transform_indices = @transform_2, window_bounds = array<i64: 1, 64>}, {pipeline_mode = #tpu.pipeline_mode<synchronous>, transform_indices = @transform_3, window_bounds = array<i64: 64, 64>}, {pipeline_mode = #tpu.pipeline_mode<synchronous>, transform_indices = @transform_4, window_bounds = array<i64: 1, 64>}, {pipeline_mode = #tpu.pipeline_mode<synchronous>, transform_indices = @transform_5, window_bounds = array<i64: 64, 32>}, {pipeline_mode = #tpu.pipeline_mode<synchronous>, transform_indices = @transform_6, window_bounds = array<i64: 1, 32>}, {pipeline_mode = #tpu.pipeline_mode<synchronous>, transform_indices = @transform_7, window_bounds = array<i64: 32, 20>}, {pipeline_mode = #tpu.pipeline_mode<synchronous>, transform_indices = @transform_8, window_bounds = array<i64: 1, 20>}, {transform_indices = @transform_9, window_bounds = array<i64: 8, 20>}]} {
    %c0 = arith.constant 0 : index
    %c0_0 = arith.constant 0 : index
    %0 = vector.load %arg1[%c0, %c0_0] : memref<8x32xf32, #tpu.memory_space<vmem>>, vector<8x32xf32>
    %c0_1 = arith.constant 0 : index
    %c0_2 = arith.constant 0 : index
    %1 = vector.load %arg2[%c0_1, %c0_2] : memref<32x64xf32, #tpu.memory_space<vmem>>, vector<32x64xf32>
    %cst = arith.constant dense<0.000000e+00> : vector<8x64xf32>
    %2 = tpu.matmul %0, %1, %cst {dimension_numbers = #tpu.dot_dimension_numbers<[1], [0], [0], [1], [0, 0, 1, 1], [], []>} : vector<8x32xf32>, vector<32x64xf32>, vector<8x64xf32> -> vector<8x64xf32>
    %c0_3 = arith.constant 0 : index
    %c0_4 = arith.constant 0 : index
    %3 = vector.load %arg3[%c0_3, %c0_4] : memref<1x64xf32, #tpu.memory_space<vmem>>, vector<1x64xf32>
    %4 = vector.broadcast %3 : vector<1x64xf32> to vector<8x64xf32>
    %5 = arith.addf %2, %4 : vector<8x64xf32>
    %cst_5 = arith.constant 0.000000e+00 : f32
    %6 = vector.broadcast %cst_5 : f32 to vector<8x64xf32>
    %7 = arith.maximumf %5, %6 : vector<8x64xf32>
    %c0_6 = arith.constant 0 : index
    %c0_7 = arith.constant 0 : index
    %8 = vector.load %arg4[%c0_6, %c0_7] : memref<64x64xf32, #tpu.memory_space<vmem>>, vector<64x64xf32>
    %cst_8 = arith.constant dense<0.000000e+00> : vector<8x64xf32>
    %9 = tpu.matmul %7, %8, %cst_8 {dimension_numbers = #tpu.dot_dimension_numbers<[1], [0], [0], [1], [0, 0, 1, 1], [], []>} : vector<8x64xf32>, vector<64x64xf32>, vector<8x64xf32> -> vector<8x64xf32>
    %c0_9 = arith.constant 0 : index
    %c0_10 = arith.constant 0 : index
    %10 = vector.load %arg5[%c0_9, %c0_10] : memref<1x64xf32, #tpu.memory_space<vmem>>, vector<1x64xf32>
    %11 = vector.broadcast %10 : vector<1x64xf32> to vector<8x64xf32>
    %12 = arith.addf %9, %11 : vector<8x64xf32>
    %cst_11 = arith.constant 0.000000e+00 : f32
    %13 = vector.broadcast %cst_11 : f32 to vector<8x64xf32>
    %14 = arith.maximumf %12, %13 : vector<8x64xf32>
    %c0_12 = arith.constant 0 : index
    %c0_13 = arith.constant 0 : index
    %15 = vector.load %arg6[%c0_12, %c0_13] : memref<64x32xf32, #tpu.memory_space<vmem>>, vector<64x32xf32>
    %cst_14 = arith.constant dense<0.000000e+00> : vector<8x32xf32>
    %16 = tpu.matmul %14, %15, %cst_14 {dimension_numbers = #tpu.dot_dimension_numbers<[1], [0], [0], [1], [0, 0, 1, 1], [], []>} : vector<8x64xf32>, vector<64x32xf32>, vector<8x32xf32> -> vector<8x32xf32>
    %c0_15 = arith.constant 0 : index
    %c0_16 = arith.constant 0 : index
    %17 = vector.load %arg7[%c0_15, %c0_16] : memref<1x32xf32, #tpu.memory_space<vmem>>, vector<1x32xf32>
    %18 = vector.broadcast %17 : vector<1x32xf32> to vector<8x32xf32>
    %19 = arith.addf %16, %18 : vector<8x32xf32>
    %cst_17 = arith.constant 0.000000e+00 : f32
    %20 = vector.broadcast %cst_17 : f32 to vector<8x32xf32>
    %21 = arith.maximumf %19, %20 : vector<8x32xf32>
    %c0_18 = arith.constant 0 : index
    %c0_19 = arith.constant 0 : index
    %22 = vector.load %arg8[%c0_18, %c0_19] : memref<32x20xf32, #tpu.memory_space<vmem>>, vector<32x20xf32>
    %cst_20 = arith.constant dense<0.000000e+00> : vector<8x20xf32>
    %23 = tpu.matmul %21, %22, %cst_20 {dimension_numbers = #tpu.dot_dimension_numbers<[1], [0], [0], [1], [0, 0, 1, 1], [], []>} : vector<8x32xf32>, vector<32x20xf32>, vector<8x20xf32> -> vector<8x20xf32>
    %c0_21 = arith.constant 0 : index
    %c0_22 = arith.constant 0 : index
    %24 = vector.load %arg9[%c0_21, %c0_22] : memref<1x20xf32, #tpu.memory_space<vmem>>, vector<1x20xf32>
    %25 = vector.broadcast %24 : vector<1x20xf32> to vector<8x20xf32>
    %26 = arith.addf %23, %25 : vector<8x20xf32>
    %c0_23 = arith.constant 0 : index
    %c0_24 = arith.constant 0 : index
    %27 = vector.load %arg10[%c0_23, %c0_24] : memref<8x20xf32, #tpu.memory_space<vmem>>, vector<8x20xf32>
    tpu.vector_store %arg10[%c0_23, %c0_24], %26 {strides = array<i32>} : memref<8x20xf32, #tpu.memory_space<vmem>>, vector<8x20xf32>,
    return
  }
  func.func @transform_0(%arg0: i32) -> (i32, i32) {
    %c0_i32 = arith.constant 0 : i32
    %c0_i32_0 = arith.constant 0 : i32
    return %arg0, %c0_i32 : i32, i32
  }
  func.func @transform_1(%arg0: i32) -> (i32, i32) {
    %c0_i32 = arith.constant 0 : i32
    %c0_i32_0 = arith.constant 0 : i32
    %c0_i32_1 = arith.constant 0 : i32
    return %c0_i32, %c0_i32_0 : i32, i32
  }
  func.func @transform_2(%arg0: i32) -> (i32, i32) {
    %c0_i32 = arith.constant 0 : i32
    %c0_i32_0 = arith.constant 0 : i32
    %c0_i32_1 = arith.constant 0 : i32
    return %c0_i32, %c0_i32_0 : i32, i32
  }
  func.func @transform_3(%arg0: i32) -> (i32, i32) {
    %c0_i32 = arith.constant 0 : i32
    %c0_i32_0 = arith.constant 0 : i32
    %c0_i32_1 = arith.constant 0 : i32
    return %c0_i32, %c0_i32_0 : i32, i32
  }
  func.func @transform_4(%arg0: i32) -> (i32, i32) {
    %c0_i32 = arith.constant 0 : i32
    %c0_i32_0 = arith.constant 0 : i32
    %c0_i32_1 = arith.constant 0 : i32
    return %c0_i32, %c0_i32_0 : i32, i32
  }
  func.func @transform_5(%arg0: i32) -> (i32, i32) {
    %c0_i32 = arith.constant 0 : i32
    %c0_i32_0 = arith.constant 0 : i32
    %c0_i32_1 = arith.constant 0 : i32
    return %c0_i32, %c0_i32_0 : i32, i32
  }
  func.func @transform_6(%arg0: i32) -> (i32, i32) {
    %c0_i32 = arith.constant 0 : i32
    %c0_i32_0 = arith.constant 0 : i32
    %c0_i32_1 = arith.constant 0 : i32
    return %c0_i32, %c0_i32_0 : i32, i32
  }
  func.func @transform_7(%arg0: i32) -> (i32, i32) {
    %c0_i32 = arith.constant 0 : i32
    %c0_i32_0 = arith.constant 0 : i32
    %c0_i32_1 = arith.constant 0 : i32
    return %c0_i32, %c0_i32_0 : i32, i32
  }
  func.func @transform_8(%arg0: i32) -> (i32, i32) {
    %c0_i32 = arith.constant 0 : i32
    %c0_i32_0 = arith.constant 0 : i32
    %c0_i32_1 = arith.constant 0 : i32
    return %c0_i32, %c0_i32_0 : i32, i32
  }
  func.func @transform_9(%arg0: i32) -> (i32, i32) {
    %c0_i32 = arith.constant 0 : i32
    %c0_i32_0 = arith.constant 0 : i32
    return %arg0, %c0_i32 : i32, i32
  }
}

</mosaic_0001>

<llo_original>
// kernel: twentyclassification_forward.1
$region0: #{twentyclassification_forward.1}
  #allocation0 [shape = 'u32[]', space=smem, size = 0x4, offset = 0x4, fixed_abs, tag = 'smem constant byte address 0x4 - core index']
  #allocation1 [shape = 'u32[72,128]{1,0:T(1,128)}', space=vmem, size = 0x9000, scoped, tag = 'internal scratch']
  %s0 = inlined_call_operand.vmem [shape: f32[8,32], index: 0, kind: input, shape index: {}]
  %s1 = inlined_call_operand.vmem [shape: f32[32,64], index: 1, kind: input, shape index: {}]
  %s2 = inlined_call_operand.vmem [shape: f32[1,64], index: 2, kind: input, shape index: {}]
  %s3 = inlined_call_operand.vmem [shape: f32[64,64], index: 3, kind: input, shape index: {}]
  %s4 = inlined_call_operand.vmem [shape: f32[1,64], index: 4, kind: input, shape index: {}]
  %s5 = inlined_call_operand.vmem [shape: f32[64,32], index: 5, kind: input, shape index: {}]
  %s6 = inlined_call_operand.vmem [shape: f32[1,32], index: 6, kind: input, shape index: {}]
  %s7 = inlined_call_operand.vmem [shape: f32[32,20], index: 7, kind: input, shape index: {}]
  %s8 = inlined_call_operand.vmem [shape: f32[1,20], index: 8, kind: input, shape index: {}]
  %s9 = inlined_call_operand.hbm [shape: f32[8,20], index: 9, kind: output, shape index: {}]
  %s10 = sld [smem:[#allocation0]]
  $region46: #{twentyclassification_forward.1} parent=0
    _
  %s12 = ssub.s32 1, %s10
  %s13 = scalar_select 0, %s12, %s10
  $region1: #{twentyclassification_forward.1} parent=0
    #allocation2 [shape = 'u8[4096]{0}', space=vmem, size = 0x1000, scoped, tag = 'output window, operand 0, single buffered']
    #allocation3 [shape = 's32[1]{0}', space=sflag, size = 0x4, scoped, tag = 'scoped memory for twentyclassification_forward.1']
    %14 = vsyncpa [#allocation3], 0
    // Predicated region
    $region2: #{twentyclassification_forward.1} parent=1 // pred_check
      _
    $region3: #{twentyclassification_forward.1} parent=1 // pred_check_branch
      %16 = sbr.rel (0) target = $region5
    $region4: #{twentyclassification_forward.1} parent=1 // pred_region
      _
    $region5: #{twentyclassification_forward.1} parent=1 // pred_fallthru
      _
    // Predicated region
    $region6: #{twentyclassification_forward.1} parent=1 // pred_check
      _
    $region7: #{twentyclassification_forward.1} parent=1 // pred_check_branch
      %18 = sbr.rel (0) target = $region9
    $region8: #{twentyclassification_forward.1} parent=1 // pred_region
      _
    $region9: #{twentyclassification_forward.1} parent=1 // pred_fallthru
      _
    // Predicated region
    $region10: #{twentyclassification_forward.1} parent=1 // pred_check
      _
    $region11: #{twentyclassification_forward.1} parent=1 // pred_check_branch
      %20 = sbr.rel (0) target = $region13
    $region12: #{twentyclassification_forward.1} parent=1 // pred_region
      _
    $region13: #{twentyclassification_forward.1} parent=1 // pred_fallthru
      _
    // Predicated region
    $region14: #{twentyclassification_forward.1} parent=1 // pred_check
      _
    $region15: #{twentyclassification_forward.1} parent=1 // pred_check_branch
      %22 = sbr.rel (0) target = $region17
    $region16: #{twentyclassification_forward.1} parent=1 // pred_region
      _
    $region17: #{twentyclassification_forward.1} parent=1 // pred_fallthru
      _
    // Predicated region
    $region18: #{twentyclassification_forward.1} parent=1 // pred_check
      _
    $region19: #{twentyclassification_forward.1} parent=1 // pred_check_branch
      %24 = sbr.rel (0) target = $region21
    $region20: #{twentyclassification_forward.1} parent=1 // pred_region
      _
    $region21: #{twentyclassification_forward.1} parent=1 // pred_fallthru
      _
    // Predicated region
    $region22: #{twentyclassification_forward.1} parent=1 // pred_check
      _
    $region23: #{twentyclassification_forward.1} parent=1 // pred_check_branch
      %26 = sbr.rel (0) target = $region25
    $region24: #{twentyclassification_forward.1} parent=1 // pred_region
      _
    $region25: #{twentyclassification_forward.1} parent=1 // pred_fallthru
      _
    // Predicated region
    $region26: #{twentyclassification_forward.1} parent=1 // pred_check
      _
    $region27: #{twentyclassification_forward.1} parent=1 // pred_check_branch
      %28 = sbr.rel (0) target = $region29
    $region28: #{twentyclassification_forward.1} parent=1 // pred_region
      _
    $region29: #{twentyclassification_forward.1} parent=1 // pred_fallthru
      _
    // Predicated region
    $region30: #{twentyclassification_forward.1} parent=1 // pred_check
      _
    $region31: #{twentyclassification_forward.1} parent=1 // pred_check_branch
      %30 = sbr.rel (0) target = $region33
    $region32: #{twentyclassification_forward.1} parent=1 // pred_region
      _
    $region33: #{twentyclassification_forward.1} parent=1 // pred_fallthru
      _
    // Predicated region
    $region34: #{twentyclassification_forward.1} parent=1 // pred_check
      _
    $region35: #{twentyclassification_forward.1} parent=1 // pred_check_branch
      %32 = sbr.rel (0) target = $region37
    $region36: #{twentyclassification_forward.1} parent=1 // pred_region
      _
    $region37: #{twentyclassification_forward.1} parent=1 // pred_fallthru
      _
    %v33 = vld [vmem:[%s0] sm:$0xff]
    %v34 = vld [vmem:[%s1] sm:$0xff]
    %v35 = vld [vmem:[%s1 + $0x8] sm:$0xff]
    %v36 = vld [vmem:[%s1 + $0x10] sm:$0xff]
    %v37 = vld [vmem:[%s1 + $0x18] sm:$0xff]
    %v38 = vld [vmem:[%s2] sm:$0x1]
    %v40 = vperm.slane %v38, 0
    %vm42 = vcmask 261120
    %v44 = vsel %vm42, %v33, 0
    %46 = vmatpush.msra.mxu0 0.0
    %47 = vmatpush.msra.mxu0 0.0
    %48 = vmatpush.msra.mxu0 0.0
    %49 = vmatpush.msra.mxu0 0.0
    %50 = vmatpush.msra.mxu0 0.0
    %51 = vmatpush.msra.mxu0 0.0
    %52 = vmatpush.msra.mxu0 0.0
    %53 = vmatpush.msra.mxu0 0.0
    %54 = vmatpush.msra.mxu0 0.0
    %55 = vmatpush.msra.mxu0 0.0
    %56 = vmatpush.msra.mxu0 0.0
    %57 = vmatpush.msra.mxu0 0.0
    %58 = vmatpush.msra.mxu0 %v37
    %59 = vmatpush.msra.mxu0 %v36
    %60 = vmatpush.msra.mxu0 %v35
    %61 = vmatpush.msra.mxu0 %v34
    %62 = vmatmul.f32.gmra.mxu0 %v44
    %v63 = vpop.f32.mrf.mxu0
    %v64 = vadd.f32 %v40, %v63
    %65 = vdwg.mxu0
    %v66 = vmax.f32 %v64, 0.0
    %v67 = vld [vmem:[%s3] sm:$0xff]
    %v68 = vld [vmem:[%s3 + $0x8] sm:$0xff]
    %v69 = vld [vmem:[%s3 + $0x10] sm:$0xff]
    %v70 = vld [vmem:[%s3 + $0x18] sm:$0xff]
    %v71 = vld [vmem:[%s3 + $0x20] sm:$0xff]
    %v72 = vld [vmem:[%s3 + $0x28] sm:$0xff]
    %v73 = vld [vmem:[%s3 + $0x30] sm:$0xff]
    %v74 = vld [vmem:[%s3 + $0x38] sm:$0xff]
    %v75 = vld [vmem:[%s4] sm:$0x1]
    %v77 = vperm.slane %v75, 0
    %vm79 = vcmask 523264
    %v81 = vsel %vm79, %v66, 0
    %83 = vmatpush.msra.mxu0 0.0
    %84 = vmatpush.msra.mxu0 0.0
    %85 = vmatpush.msra.mxu0 0.0
    %86 = vmatpush.msra.mxu0 0.0
    %87 = vmatpush.msra.mxu0 0.0
    %88 = vmatpush.msra.mxu0 0.0
    %89 = vmatpush.msra.mxu0 0.0
    %90 = vmatpush.msra.mxu0 0.0
    %91 = vmatpush.msra.mxu0 %v74
    %92 = vmatpush.msra.mxu0 %v73
    %93 = vmatpush.msra.mxu0 %v72
    %94 = vmatpush.msra.mxu0 %v71
    %95 = vmatpush.msra.mxu0 %v70
    %96 = vmatpush.msra.mxu0 %v69
    %97 = vmatpush.msra.mxu0 %v68
    %98 = vmatpush.msra.mxu0 %v67
    %99 = vmatmul.f32.gmra.mxu0 %v81
    %v100 = vpop.f32.mrf.mxu0
    %v101 = vadd.f32 %v77, %v100
    %102 = vdwg.mxu0
    %v103 = vmax.f32 %v101, 0.0
    %v104 = vld [vmem:[%s5] sm:$0xff]
    %v105 = vld [vmem:[%s5 + $0x8] sm:$0xff]
    %v106 = vld [vmem:[%s5 + $0x10] sm:$0xff]
    %v107 = vld [vmem:[%s5 + $0x18] sm:$0xff]
    %v108 = vld [vmem:[%s5 + $0x20] sm:$0xff]
    %v109 = vld [vmem:[%s5 + $0x28] sm:$0xff]
    %v110 = vld [vmem:[%s5 + $0x30] sm:$0xff]
    %v111 = vld [vmem:[%s5 + $0x38] sm:$0xff]
    %v112 = vld [vmem:[%s6] sm:$0x1]
    %v114 = vperm.slane %v112, 0
    %v117 = vsel %vm79, %v103, 0
    %119 = vmatpush.msra.mxu0 0.0
    %120 = vmatpush.msra.mxu0 0.0
    %121 = vmatpush.msra.mxu0 0.0
    %122 = vmatpush.msra.mxu0 0.0
    %123 = vmatpush.msra.mxu0 0.0
    %124 = vmatpush.msra.mxu0 0.0
    %125 = vmatpush.msra.mxu0 0.0
    %126 = vmatpush.msra.mxu0 0.0
    %127 = vmatpush.msra.mxu0 %v111
    %128 = vmatpush.msra.mxu0 %v110
    %129 = vmatpush.msra.mxu0 %v109
    %130 = vmatpush.msra.mxu0 %v108
    %131 = vmatpush.msra.mxu0 %v107
    %132 = vmatpush.msra.mxu0 %v106
    %133 = vmatpush.msra.mxu0 %v105
    %134 = vmatpush.msra.mxu0 %v104
    %135 = vmatmul.f32.gmra.mxu0 %v117
    %v136 = vpop.f32.mrf.mxu0
    %v137 = vadd.f32 %v114, %v136
    %138 = vdwg.mxu0
    %v139 = vmax.f32 %v137, 0.0
    %v140 = vld [vmem:[%s7] sm:$0xff]
    %v141 = vld [vmem:[%s7 + $0x8] sm:$0xff]
    %v142 = vld [vmem:[%s7 + $0x10] sm:$0xff]
    %v143 = vld [vmem:[%s7 + $0x18] sm:$0xff]
    %v144 = vld [vmem:[%s8] sm:$0x1]
    %v146 = vperm.slane %v144, 0
    %v149 = vsel %vm42, %v139, 0
    %151 = vmatpush.msra.mxu0 0.0
    %152 = vmatpush.msra.mxu0 0.0
    %153 = vmatpush.msra.mxu0 0.0
    %154 = vmatpush.msra.mxu0 0.0
    %155 = vmatpush.msra.mxu0 0.0
    %156 = vmatpush.msra.mxu0 0.0
    %157 = vmatpush.msra.mxu0 0.0
    %158 = vmatpush.msra.mxu0 0.0
    %159 = vmatpush.msra.mxu0 0.0
    %160 = vmatpush.msra.mxu0 0.0
    %161 = vmatpush.msra.mxu0 0.0
    %162 = vmatpush.msra.mxu0 0.0
    %163 = vmatpush.msra.mxu0 %v143
    %164 = vmatpush.msra.mxu0 %v142
    %165 = vmatpush.msra.mxu0 %v141
    %166 = vmatpush.msra.mxu0 %v140
    %167 = vmatmul.f32.gmra.mxu0 %v149
    %v168 = vpop.f32.mrf.mxu0
    %v169 = vadd.f32 %v146, %v168
    %170 = vdwg.mxu0
    %vm171 = vcmask 162816
    %172 = vst.msk [vmem:[#allocation2] sm:$0xff] %vm171, %v169
    // Predicated region
    $region38: #{twentyclassification_forward.1} parent=1 // pred_check
      _
    $region39: #{twentyclassification_forward.1} parent=1 // pred_check_branch
      %174 = sbr.rel (0) target = $region41
    $region40: #{twentyclassification_forward.1} parent=1 // pred_region
      %176 = vsyncadd [#allocation3], 0
      %s178 = sshll.u32 [#allocation2], 4
      %s179 = int_to_ptr.vmem [resolvable:$true] %s178
      %s180 = sshll.u32 %s9, 4
      %s181 = int_to_ptr.hbm [resolvable:$true] %s180
      %183 = dma.vmem_to_hbm [thread:$0]  %s179, 128, %s181, [#allocation3]
    $region41: #{twentyclassification_forward.1} parent=1 // pred_fallthru
      _
    // Predicated region
    $region42: #{twentyclassification_forward.1} parent=1 // pred_check
      _
    $region43: #{twentyclassification_forward.1} parent=1 // pred_check_branch
      %185 = sbr.rel (0) target = $region45
    $region44: #{twentyclassification_forward.1} parent=1 // pred_region
      %187 = dma.done [#allocation3], 128
    $region45: #{twentyclassification_forward.1} parent=1 // pred_fallthru
      _
    %188 = vsyncpa [#allocation3], 1

</llo_original>
